<compile_context>
chip_gen: v5e
topology: v5e:2x2
jax: 0.10.0
libtpu: 0.0.40
codegen_flags: <defaults>
</compile_context>

<pallas_src>
import functools

import jax
import jax.numpy as jnp
from jax import lax
from jax.experimental import pallas as pl
from jax.experimental.pallas import tpu as pltpu


def _shift(x, k, axis):
    """result[..., i, ...] = x[..., (i + k) % n, ...] along `axis` (circular)."""
    axis = axis % x.ndim
    n = x.shape[axis]
    return pltpu.roll(x, (-k) % n, axis)


def _reg_kernel(disp_ref, out_ref, *, energy_type, scale, h_valid, w_valid):
    s = pl.program_id(1)

    @pl.when(s == 0)
    def _init():
        out_ref[...] = jnp.zeros_like(out_ref)

    x = disp_ref[...].astype(jnp.float32)          # (P, Hp, Wp) block of planes
    P, Hp, Wp = x.shape

    # Raw (un-halved) central differences on full-width vregs; only interior
    # rows/cols are valid, the wrapped / padded border is masked out of the
    # reduction below.  All constant factors are folded into `scale`.
    if energy_type == "bending":
        gx = _shift(x, +1, 1) - _shift(x, -1, 1)                   # d/dH (for gxy only)
        gxx = _shift(x, +2, 1) + _shift(x, -2, 1) - 2.0 * x        # d2/dH2 directly from x
        gyy = _shift(x, +2, 2) + _shift(x, -2, 2) - 2.0 * x        # d2/dW2 directly from x
        gxy = _shift(gx, +1, 2) - _shift(gx, -1, 2)                # d2/dHdW
        contrib = gxx * gxx + gyy * gyy + 2.0 * (gxy * gxy)
        border = 2
    elif energy_type == "gradient-l2":
        gx = _shift(x, +1, 1) - _shift(x, -1, 1)
        gy = _shift(x, +1, 2) - _shift(x, -1, 2)
        contrib = gx * gx + gy * gy
        border = 1
    elif energy_type == "gradient-l1":
        gx = _shift(x, +1, 1) - _shift(x, -1, 1)
        gy = _shift(x, +1, 2) - _shift(x, -1, 2)
        contrib = jnp.abs(gx) + jnp.abs(gy)
        border = 1
    else:
        raise Exception("Not recognised local regulariser!")

    # Reduce over W on the (otherwise idle) MXU.  The column border / padding
    # mask lives in column 0 of a (Wp, 128) ones-like RHS, so no full-plane
    # mask multiply and no full cross-lane XLU reduce are needed; the matmul
    # is fully (8,128)-tile aligned.
    wrow = lax.broadcasted_iota(jnp.int32, (Wp, 128), 0)
    wcol = lax.broadcasted_iota(jnp.int32, (Wp, 128), 1)
    colmask = ((wrow >= border) & (wrow <= w_valid - 1 - border)
               & (wcol == 0)).astype(jnp.float32)
    colsum = jnp.dot(contrib.reshape(P * Hp, Wp), colmask,
                     preferred_element_type=jnp.float32)           # (P*Hp, 128), col 0 live

    # Row border / padding mask is only (P*Hp, 1) wide -> a few cheap VPU ops.
    row = lax.broadcasted_iota(jnp.int32, (P * Hp, 1), 0) % Hp
    rowmask = ((row >= border) & (row <= h_valid - 1 - border)).astype(jnp.float32)
    tile_sum = jnp.sum(colsum * rowmask)

    out_ref[...] = out_ref[...] + tile_sum

    @pl.when(s == pl.num_programs(1) - 1)
    def _finalize():
        out_ref[...] = out_ref[...] * scale


def _sublane_multiple(dtype):
    itemsize = jnp.dtype(dtype).itemsize
    return 8 * max(1, 4 // itemsize)        # f32 -> 8, bf16 -> 16, int8/fp8 -> 32


def displacement_regularizer_2d(disp, energy_type="gradient-l2"):
    """Pallas implementation of DisplacementRegularizer2D.forward."""
    B, C, H, W = disp.shape
    assert C == 2, "2D displacement field must have exactly 2 channels"

    # Fold every constant factor (the /2's of the central differences, the
    # trailing /2 of the gradient norms, and the mean divisor over the cropped
    # extents) into one scalar applied once to the accumulated sum.
    if energy_type == "bending":
        assert H >= 5 and W >= 5, "bending energy needs H >= 5 and W >= 5"
        count = B * C * (H - 4) * (W - 4)
        scale = 1.0 / (16.0 * count)
    elif energy_type == "gradient-l2":
        assert H >= 3 and W >= 3, "gradient energy needs H >= 3 and W >= 3"
        count = B * C * (H - 2) * (W - 2)
        scale = 1.0 / (8.0 * count)
    elif energy_type == "gradient-l1":
        assert H >= 3 and W >= 3, "gradient energy needs H >= 3 and W >= 3"
        count = B * C * (H - 2) * (W - 2)
        scale = 1.0 / (4.0 * count)
    else:
        raise Exception("Not recognised local regulariser!")

    nplanes = B * C
    planes = disp.reshape(nplanes, H, W)        # metadata-only view, keep input dtype

    # Pad spatial dims to native vreg tile multiples (sublane x 128 lanes) so
    # the in-kernel rolls stay on unmasked, relayout-free tiles.  Padding is
    # zero and excluded from the reduction by the in-kernel masks.
    sub = _sublane_multiple(disp.dtype)
    Hp = ((H + sub - 1) // sub) * sub
    Wp = ((W + 127) // 128) * 128
    if (Hp, Wp) != (H, W):
        planes = jnp.pad(planes, ((0, 0), (0, Hp - H), (0, Wp - W)))

    # Planes per grid step: keep (double-buffered input) + full-block f32
    # temporaries comfortably inside a VMEM budget that is safe on all
    # generations (v7x has only 64 MiB physical / ~48 MiB usable scoped).
    itemsize = jnp.dtype(disp.dtype).itemsize
    temps = 12 if energy_type == "bending" else 8           # f32 plane-equivalents
    per_plane_bytes = Hp * Wp * (2 * itemsize + temps * 4)
    budget = 24 * 1024 * 1024
    max_p = max(1, budget // per_plane_bytes)
    P = 1
    for d in range(1, nplanes + 1):
        if nplanes % d == 0 and d <= max_p:
            P = d
    # TODO(synk): for planes so large that even P=1 exceeds the budget, add an
    # H-strip grid axis with 2-row halos instead of relying on the VMEM limit.

    nblk = nplanes // P
    ncores = 2 if (nblk >= 2 and nblk % 2 == 0) else 1       # v7x: use both TensorCores
    sblk = nblk // ncores

    kernel = functools.partial(_reg_kernel, energy_type=energy_type,
                               scale=scale, h_valid=H, w_valid=W)
    out = pl.pallas_call(
        kernel,
        out_shape=jax.ShapeDtypeStruct((ncores, 1), jnp.float32),
        grid_spec=pltpu.PrefetchScalarGridSpec(
            num_scalar_prefetch=0,
            grid=(ncores, sblk),
            in_specs=[pl.BlockSpec((P, Hp, Wp), lambda c, s: (c * sblk + s, 0, 0))],
            out_specs=pl.BlockSpec((1, 1), lambda c, s: (c, 0)),
        ),
        compiler_params=pltpu.CompilerParams(
            # Core axis independent (megacore-shardable); plane-block axis
            # feeds each core's resident accumulator -> reduction axis.
            dimension_semantics=("parallel", "arbitrary"),
            vmem_limit_bytes=48 * 1024 * 1024,
        ),
    )(planes)
    return jnp.sum(out)


# --------------------------- pure-JAX reference ---------------------------- #

def _grad_dx(x):
    return (x[:, :, 2:, 1:-1] - x[:, :, :-2, 1:-1]) * 0.5


def _grad_dy(x):
    return (x[:, :, 1:-1, 2:] - x[:, :, 1:-1, :-2]) * 0.5


def _reference(disp, energy_type="gradient-l2"):
    """Pure-JAX reference mirroring the PyTorch module, for validation."""
    disp = disp.astype(jnp.float32)
    dTdx = _grad_dx(disp)
    dTdy = _grad_dy(disp)
    if energy_type == "bending":
        dTdxx = _grad_dx(dTdx)
        dTdyy = _grad_dy(dTdy)
        dTdxy = _grad_dy(dTdx)
        return jnp.mean(dTdxx ** 2 + dTdyy ** 2 + 2.0 * dTdxy ** 2)
    if energy_type == "gradient-l2":
        return jnp.mean(dTdx ** 2 + dTdy ** 2) / 2.0
    if energy_type == "gradient-l1":
        return jnp.mean(jnp.abs(dTdx) + jnp.abs(dTdy)) / 2.0
    raise Exception("Not recognised local regulariser!")


if __name__ == "__main__":
    key = jax.random.PRNGKey(0)

    # Aligned case: batch=2, channels=2 (2D field), spatial 16 x 128.
    disp = jax.random.normal(key, (2, 2, 16, 128), dtype=jnp.float32)
    # Unaligned case (exercises the pad-and-mask path): spatial 15 x 100.
    disp_odd = jax.random.normal(jax.random.fold_in(key, 1), (1, 2, 15, 100),
                                 dtype=jnp.float32)
    # bf16 input path (cast to f32 happens in-kernel).
    disp_bf16 = disp.astype(jnp.bfloat16)

    cases = []
    for et in ("gradient-l2", "gradient-l1", "bending"):
        cases.append((et, disp))
        cases.append((et, disp_odd))
    cases.append(("gradient-l2", disp_bf16))

    for et, d in cases:
        out = jax.block_until_ready(displacement_regularizer_2d(d, energy_type=et))
        ref = _reference(d, et)
        assert jnp.allclose(out, ref, atol=1e-5, rtol=1e-4), \
            (et, tuple(d.shape), str(d.dtype), float(out), float(ref))

    print("KERNEL_OK")
</pallas_src>

<mosaic_0001>
module attributes {stable_mosaic.version = 11 : i64} {
  func.func @_reg_kernel(%arg0: i32, %arg1: i32, %arg2: memref<4x16x128xf32, #tpu.memory_space<vmem>>, %arg3: memref<1x1xf32, #tpu.memory_space<vmem>>) attributes {dimension_semantics = [#tpu.dimension_semantics<parallel>, #tpu.dimension_semantics<arbitrary>], iteration_bounds = array<i64: 1, 1>, scalar_prefetch = 0 : i64, scratch_operands = 0 : i64, tpu.core_type = #tpu.core_type<tc>, window_params = [{transform_indices = @transform_0, window_bounds = array<i64: 4, 16, 128>}, {transform_indices = @transform_1, window_bounds = array<i64: 1, 1>}]} {
    %c0_i32 = arith.constant 0 : i32
    %0 = arith.cmpi eq, %arg1, %c0_i32 : i32
    %1 = arith.extui %0 : i1 to i32
    %c0_i32_0 = arith.constant 0 : i32
    %2 = arith.cmpi ne, %1, %c0_i32_0 : i32
    scf.if %2 {
      %cst_19 = arith.constant 0.000000e+00 : f32
      %64 = vector.broadcast %cst_19 : f32 to vector<1x1xf32>
      %c0_20 = arith.constant 0 : index
      %c0_21 = arith.constant 0 : index
      %65 = vector.load %arg3[%c0_20, %c0_21] : memref<1x1xf32, #tpu.memory_space<vmem>>, vector<1x1xf32>
      tpu.vector_store %arg3[%c0_20, %c0_21], %64 {strides = array<i32>} : memref<1x1xf32, #tpu.memory_space<vmem>>, vector<1x1xf32>,
    } else {
    }
    %c0 = arith.constant 0 : index
    %c0_1 = arith.constant 0 : index
    %c0_2 = arith.constant 0 : index
    %3 = vector.load %arg2[%c0, %c0_1, %c0_2] : memref<4x16x128xf32, #tpu.memory_space<vmem>>, vector<4x16x128xf32>
    %c15_i32 = arith.constant 15 : i32
    %4 = tpu.dynamic_rotate %3 by %c15_i32 dim 1 : vector<4x16x128xf32>, i32 -> vector<4x16x128xf32>
    %c1_i32 = arith.constant 1 : i32
    %5 = tpu.dynamic_rotate %3 by %c1_i32 dim 1 : vector<4x16x128xf32>, i32 -> vector<4x16x128xf32>
    %6 = arith.subf %4, %5 : vector<4x16x128xf32>
    %c127_i32 = arith.constant 127 : i32
    %7 = tpu.dynamic_rotate %3 by %c127_i32 dim 2 : vector<4x16x128xf32>, i32 -> vector<4x16x128xf32>
    %c1_i32_3 = arith.constant 1 : i32
    %8 = tpu.dynamic_rotate %3 by %c1_i32_3 dim 2 : vector<4x16x128xf32>, i32 -> vector<4x16x128xf32>
    %9 = arith.subf %7, %8 : vector<4x16x128xf32>
    %10 = arith.mulf %6, %6 : vector<4x16x128xf32>
    %11 = arith.mulf %9, %9 : vector<4x16x128xf32>
    %12 = arith.addf %10, %11 : vector<4x16x128xf32>
    %13 = tpu.iota {dimensions = array<i32: 0>} : vector<128x128xi32>
    %14 = tpu.iota {dimensions = array<i32: 1>} : vector<128x128xi32>
    %c1_i32_4 = arith.constant 1 : i32
    %15 = vector.broadcast %c1_i32_4 : i32 to vector<128x128xi32>
    %16 = arith.cmpi sge, %13, %15 : vector<128x128xi32>
    %c126_i32 = arith.constant 126 : i32
    %17 = vector.broadcast %c126_i32 : i32 to vector<128x128xi32>
    %18 = arith.cmpi sle, %13, %17 : vector<128x128xi32>
    %19 = arith.andi %16, %18 : vector<128x128xi1>
    %c0_i32_5 = arith.constant 0 : i32
    %20 = vector.broadcast %c0_i32_5 : i32 to vector<128x128xi32>
    %21 = arith.cmpi eq, %14, %20 : vector<128x128xi32>
    %22 = arith.andi %19, %21 : vector<128x128xi1>
    %23 = arith.extui %22 : vector<128x128xi1> to vector<128x128xi32>
    %24 = arith.sitofp %23 : vector<128x128xi32> to vector<128x128xf32>
    %25 = vector.shape_cast %12 : vector<4x16x128xf32> to vector<64x128xf32>
    %cst = arith.constant dense<0.000000e+00> : vector<64x128xf32>
    %26 = tpu.matmul %25, %24, %cst {dimension_numbers = #tpu.dot_dimension_numbers<[1], [0], [0], [1], [0, 0, 1, 1], [], []>} : vector<64x128xf32>, vector<128x128xf32>, vector<64x128xf32> -> vector<64x128xf32>
    %27 = tpu.iota {dimensions = array<i32: 0>} : vector<64x1xi32>
    %c16_i32 = arith.constant 16 : i32
    %c0_i32_6 = arith.constant 0 : i32
    %28 = arith.cmpi eq, %c16_i32, %c0_i32_6 : i32
    %c1_i32_7 = arith.constant 1 : i32
    %29 = arith.select %28, %c1_i32_7, %c16_i32 : i32
    %30 = vector.broadcast %29 : i32 to vector<64x1xi32>
    %31 = arith.remsi %27, %30 : vector<64x1xi32>
    %c0_i32_8 = arith.constant 0 : i32
    %32 = vector.broadcast %c0_i32_8 : i32 to vector<64x1xi32>
    %33 = arith.cmpi ne, %31, %32 : vector<64x1xi32>
    %c0_i32_9 = arith.constant 0 : i32
    %34 = vector.broadcast %c0_i32_9 : i32 to vector<64x1xi32>
    %35 = arith.cmpi slt, %31, %34 : vector<64x1xi32>
    %c0_i32_10 = arith.constant 0 : i32
    %36 = arith.cmpi slt, %29, %c0_i32_10 : i32
    %37 = vector.broadcast %36 : i1 to vector<64x1xi1>
    %38 = vector.broadcast %37 : vector<64x1xi1> to vector<64x1xi1>
    %39 = arith.xori %35, %38 : vector<64x1xi1>
    %40 = arith.andi %39, %33 : vector<64x1xi1>
    %41 = vector.broadcast %29 : i32 to vector<64x1xi32>
    %42 = arith.addi %31, %41 : vector<64x1xi32>
    %43 = arith.select %40, %42, %31 : vector<64x1xi1>, vector<64x1xi32>
    %c1_i32_11 = arith.constant 1 : i32
    %44 = vector.broadcast %c1_i32_11 : i32 to vector<64x1xi32>
    %45 = arith.cmpi sge, %43, %44 : vector<64x1xi32>
    %c14_i32 = arith.constant 14 : i32
    %46 = vector.broadcast %c14_i32 : i32 to vector<64x1xi32>
    %47 = arith.cmpi sle, %43, %46 : vector<64x1xi32>
    %48 = arith.andi %45, %47 : vector<64x1xi1>
    %49 = arith.extui %48 : vector<64x1xi1> to vector<64x1xi32>
    %50 = arith.sitofp %49 : vector<64x1xi32> to vector<64x1xf32>
    %51 = vector.broadcast %50 : vector<64x1xf32> to vector<64x128xf32>
    %52 = arith.mulf %26, %51 : vector<64x128xf32>
    %53 = vector.shape_cast %52 : vector<64x128xf32> to vector<1x64x128xf32>
    %cst_12 = arith.constant dense<0.000000e+00> : vector<1xf32>
    %54 = vector.multi_reduction <add>, %53, %cst_12 [1, 2] : vector<1x64x128xf32> to vector<1xf32>
    %55 = vector.shape_cast %54 : vector<1xf32> to vector<1x1x1xf32>
    %56 = vector.extract %55[0, 0, 0] : f32 from vector<1x1x1xf32>
    %c0_13 = arith.constant 0 : index
    %c0_14 = arith.constant 0 : index
    %57 = vector.load %arg3[%c0_13, %c0_14] : memref<1x1xf32, #tpu.memory_space<vmem>>, vector<1x1xf32>
    %58 = vector.broadcast %56 : f32 to vector<1x1xf32>
    %59 = arith.addf %57, %58 : vector<1x1xf32>
    %c0_15 = arith.constant 0 : index
    %c0_16 = arith.constant 0 : index
    %60 = vector.load %arg3[%c0_15, %c0_16] : memref<1x1xf32, #tpu.memory_space<vmem>>, vector<1x1xf32>
    tpu.vector_store %arg3[%c0_15, %c0_16], %59 {strides = array<i32>} : memref<1x1xf32, #tpu.memory_space<vmem>>, vector<1x1xf32>,
    %c0_i32_17 = arith.constant 0 : i32
    %61 = arith.cmpi eq, %arg1, %c0_i32_17 : i32
    %62 = arith.extui %61 : i1 to i32
    %c0_i32_18 = arith.constant 0 : i32
    %63 = arith.cmpi ne, %62, %c0_i32_18 : i32
    scf.if %63 {
      %c0_19 = arith.constant 0 : index
      %c0_20 = arith.constant 0 : index
      %64 = vector.load %arg3[%c0_19, %c0_20] : memref<1x1xf32, #tpu.memory_space<vmem>>, vector<1x1xf32>
      %cst_21 = arith.constant 1.77154197E-5 : f32
      %65 = vector.broadcast %cst_21 : f32 to vector<1x1xf32>
      %66 = arith.mulf %64, %65 : vector<1x1xf32>
      %c0_22 = arith.constant 0 : index
      %c0_23 = arith.constant 0 : index
      %67 = vector.load %arg3[%c0_22, %c0_23] : memref<1x1xf32, #tpu.memory_space<vmem>>, vector<1x1xf32>
      tpu.vector_store %arg3[%c0_22, %c0_23], %66 {strides = array<i32>} : memref<1x1xf32, #tpu.memory_space<vmem>>, vector<1x1xf32>,
    } else {
    }
    return
  }
  func.func @transform_0(%arg0: i32, %arg1: i32) -> (i32, i32, i32) {
    %c1_i32 = arith.constant 1 : i32
    %0 = arith.muli %arg0, %c1_i32 : i32
    %1 = arith.addi %0, %arg1 : i32
    %c0_i32 = arith.constant 0 : i32
    %c0_i32_0 = arith.constant 0 : i32
    %c0_i32_1 = arith.constant 0 : i32
    return %1, %c0_i32, %c0_i32_0 : i32, i32, i32
  }
  func.func @transform_1(%arg0: i32, %arg1: i32) -> (i32, i32) {
    %c0_i32 = arith.constant 0 : i32
    %c0_i32_0 = arith.constant 0 : i32
    return %arg0, %c0_i32 : i32, i32
  }
}

</mosaic_0001>

<llo_original>
// kernel: tpu_custom_call.1
$region0: #{tpu_custom_call.1}
  #allocation0 [shape = 'u32[]', space=smem, size = 0x4, offset = 0x4, fixed_abs, tag = 'smem constant byte address 0x4 - core index']
  #allocation1 [shape = 'u32[72,128]{1,0:T(1,128)}', space=vmem, size = 0x9000, scoped, tag = 'internal scratch']
  %s0 = inlined_call_operand.hbm [shape: f32[4,16,128], index: 0, kind: input, shape index: {}]
  %s1 = inlined_call_operand.hbm [shape: f32[1,1], index: 1, kind: output, shape index: {}]
  %s2 = sld [smem:[#allocation0]]
  $region26: #{tpu_custom_call.1} parent=0
    _
  %s4 = ssub.s32 1, %s2
  %s5 = scalar_select 0, %s4, %s2
  $region1: #{tpu_custom_call.1} parent=0
    #allocation2 [shape = 'u8[32768]{0}', space=vmem, size = 0x8000, scoped, tag = 'input window, operand 0, single buffered']
    #allocation3 [shape = 's32[1]{0}', space=sflag, size = 0x4, scoped, tag = 'scoped memory for tpu_custom_call.1']
    #allocation4 [shape = 's32[1]{0}', space=sflag, size = 0x4, scoped, tag = 'scoped memory for tpu_custom_call.1']
    #allocation5 [shape = 'u8[512]{0}', space=vmem, size = 0x400, scoped, tag = 'output window, operand 0, single buffered']
    %6 = vsyncpa [#allocation3], 0
    %7 = vsyncpa [#allocation4], 0
    // Predicated region
    $region2: #{tpu_custom_call.1} parent=1 // pred_check
      _
    $region3: #{tpu_custom_call.1} parent=1 // pred_check_branch
      %9 = sbr.rel (0) target = $region5
    $region4: #{tpu_custom_call.1} parent=1 // pred_region
      %s10 = sadd.s32 0, 0
      %s11 = smul.u32 4, %s10
      %13 = vsyncadd [#allocation3], 0
      %s14 = smul.addr %s11, 2
      %s15 = smul.addr %s14, 8
      %s16 = scalar_lea.hbm %s0, %s15
      %s17 = sshll.u32 %s16, 4
      %s18 = int_to_ptr.hbm [resolvable:$true] %s17
      %s19 = sshll.u32 [#allocation2], 4
      %s20 = int_to_ptr.vmem [resolvable:$true] %s19
      %25 = dma.hbm_to_vmem [thread:$0]  %s18, 1024, %s20, [#allocation3], 128, 128, 8
    $region5: #{tpu_custom_call.1} parent=1 // pred_fallthru
      _
    // Predicated region
    $region6: #{tpu_custom_call.1} parent=1 // pred_check
      _
    $region7: #{tpu_custom_call.1} parent=1 // pred_check_branch
      %27 = sbr.rel (0) target = $region9
    $region8: #{tpu_custom_call.1} parent=1 // pred_region
      %29 = dma.done [#allocation3], 1024
    $region9: #{tpu_custom_call.1} parent=1 // pred_fallthru
      _
    %s30 = sadd.s32 0, 0
    %s31 = smul.u32 4, %s30
    %p32 = scmp.eq.s32.totalorder 0, 0
    // Predicated region
    $region10: #{tpu_custom_call.1} parent=1 // pred_check
      %p33 = pneg %p32
    $region11: #{tpu_custom_call.1} parent=1 // pred_check_branch
      %35 = sbr.rel (%p33) target = $region13
    $region12: #{tpu_custom_call.1} parent=1 // pred_region
      %vm36 = vcmask 0
      %37 = vst.msk [vmem:[#allocation5] sm:$0x1] %vm36, 0.0
    $region13: #{tpu_custom_call.1} parent=1 // pred_fallthru
      _
    %v38 = vld [vmem:[#allocation2] sm:$0xff]
    %v39 = vld [vmem:[#allocation2 + $0x8] sm:$0xff]
    %v40 = vld [vmem:[#allocation2 + $0x10] sm:$0xff]
    %v41 = vld [vmem:[#allocation2 + $0x18] sm:$0xff]
    %v42 = vld [vmem:[#allocation2 + $0x20] sm:$0xff]
    %v43 = vld [vmem:[#allocation2 + $0x28] sm:$0xff]
    %v44 = vld [vmem:[#allocation2 + $0x30] sm:$0xff]
    %v45 = vld [vmem:[#allocation2 + $0x38] sm:$0xff]
    %v46 = vrot.slane %v38, 1
    %v47 = vrot.slane %v40, 1
    %v48 = vrot.slane %v42, 1
    %v49 = vrot.slane %v44, 1
    %v50 = vrot.slane %v39, 1
    %v51 = vrot.slane %v41, 1
    %v52 = vrot.slane %v43, 1
    %v53 = vrot.slane %v45, 1
    %v54 = vlaneseq
    %v55 = vshrl.u32 %v54, 7
    %vm56 = vcmp.lt.s32.totalorder %v55, 7
    %v57 = vsel %vm56, %v46, %v50
    %v58 = vsel %vm56, %v47, %v51
    %v59 = vsel %vm56, %v48, %v52
    %v60 = vsel %vm56, %v49, %v53
    %v61 = vsel %vm56, %v50, %v46
    %v62 = vsel %vm56, %v51, %v47
    %v63 = vsel %vm56, %v52, %v48
    %v64 = vsel %vm56, %v53, %v49
    %v65 = vrot.slane %v38, 7
    %v66 = vrot.slane %v40, 7
    %v67 = vrot.slane %v42, 7
    %v68 = vrot.slane %v44, 7
    %v69 = vrot.slane %v39, 7
    %v70 = vrot.slane %v41, 7
    %v71 = vrot.slane %v43, 7
    %v72 = vrot.slane %v45, 7
    %vm73 = vcmp.lt.s32.totalorder %v55, 1
    %v74 = vsel %vm73, %v65, %v69
    %v75 = vsel %vm73, %v66, %v70
    %v76 = vsel %vm73, %v67, %v71
    %v77 = vsel %vm73, %v68, %v72
    %v78 = vsel %vm73, %v69, %v65
    %v79 = vsel %vm73, %v70, %v66
    %v80 = vsel %vm73, %v71, %v67
    %v81 = vsel %vm73, %v72, %v68
    %v82 = vsub.f32 %v57, %v78
    %v83 = vsub.f32 %v61, %v74
    %v84 = vsub.f32 %v58, %v79
    %v85 = vsub.f32 %v62, %v75
    %v86 = vsub.f32 %v59, %v80
    %v87 = vsub.f32 %v63, %v76
    %v88 = vsub.f32 %v60, %v81
    %v89 = vsub.f32 %v64, %v77
    %90 = vrot.lane.b32.xlu0 %v38, 127
    %v91 = vpop.permute.xlu0 %90
    %92 = vrot.lane.b32.xlu0 %v39, 127
    %v93 = vpop.permute.xlu0 %92
    %94 = vrot.lane.b32.xlu0 %v40, 127
    %v95 = vpop.permute.xlu0 %94
    %96 = vrot.lane.b32.xlu0 %v41, 127
    %v97 = vpop.permute.xlu0 %96
    %98 = vrot.lane.b32.xlu0 %v42, 127
    %v99 = vpop.permute.xlu0 %98
    %100 = vrot.lane.b32.xlu0 %v43, 127
    %v101 = vpop.permute.xlu0 %100
    %102 = vrot.lane.b32.xlu0 %v44, 127
    %v103 = vpop.permute.xlu0 %102
    %104 = vrot.lane.b32.xlu0 %v45, 127
    %v105 = vpop.permute.xlu0 %104
    %106 = vrot.lane.b32.xlu0 %v38, 1
    %v107 = vpop.permute.xlu0 %106
    %108 = vrot.lane.b32.xlu0 %v39, 1
    %v109 = vpop.permute.xlu0 %108
    %110 = vrot.lane.b32.xlu0 %v40, 1
    %v111 = vpop.permute.xlu0 %110
    %112 = vrot.lane.b32.xlu0 %v41, 1
    %v113 = vpop.permute.xlu0 %112
    %114 = vrot.lane.b32.xlu0 %v42, 1
    %v115 = vpop.permute.xlu0 %114
    %116 = vrot.lane.b32.xlu0 %v43, 1
    %v117 = vpop.permute.xlu0 %116
    %118 = vrot.lane.b32.xlu0 %v44, 1
    %v119 = vpop.permute.xlu0 %118
    %120 = vrot.lane.b32.xlu0 %v45, 1
    %v121 = vpop.permute.xlu0 %120
    %v122 = vsub.f32 %v91, %v107
    %v123 = vsub.f32 %v93, %v109
    %v124 = vsub.f32 %v95, %v111
    %v125 = vsub.f32 %v97, %v113
    %v126 = vsub.f32 %v99, %v115
    %v127 = vsub.f32 %v101, %v117
    %v128 = vsub.f32 %v103, %v119
    %v129 = vsub.f32 %v105, %v121
    %v130 = vmul.f32 %v82, %v82
    %v131 = vmul.f32 %v83, %v83
    %v132 = vmul.f32 %v84, %v84
    %v133 = vmul.f32 %v85, %v85
    %v134 = vmul.f32 %v86, %v86
    %v135 = vmul.f32 %v87, %v87
    %v136 = vmul.f32 %v88, %v88
    %v137 = vmul.f32 %v89, %v89
    %v138 = vmul.f32 %v122, %v122
    %v139 = vmul.f32 %v123, %v123
    %v140 = vmul.f32 %v124, %v124
    %v141 = vmul.f32 %v125, %v125
    %v142 = vmul.f32 %v126, %v126
    %v143 = vmul.f32 %v127, %v127
    %v144 = vmul.f32 %v128, %v128
    %v145 = vmul.f32 %v129, %v129
    %v146 = vadd.f32 %v130, %v138
    %v147 = vadd.f32 %v131, %v139
    %v148 = vadd.f32 %v132, %v140
    %v149 = vadd.f32 %v133, %v141
    %v150 = vadd.f32 %v134, %v142
    %v151 = vadd.f32 %v135, %v143
    %v152 = vadd.f32 %v136, %v144
    %v153 = vadd.f32 %v137, %v145
    %v154 = vadd.s32 %v55, 8
    %v155 = vadd.s32 %v55, 16
    %v156 = vadd.s32 %v55, 24
    %v157 = vadd.s32 %v55, 32
    %v158 = vadd.s32 %v55, 40
    %v159 = vadd.s32 %v55, 48
    %v160 = vadd.s32 %v55, 56
    %v161 = vadd.s32 %v55, 64
    %v162 = vadd.s32 %v55, 72
    %v163 = vadd.s32 %v55, 80
    %v164 = vadd.s32 %v55, 88
    %v165 = vadd.s32 %v55, 96
    %v166 = vadd.s32 %v55, 104
    %v167 = vadd.s32 %v55, 112
    %v168 = vadd.s32 %v55, 120
    %v169 = vlaneseq
    %v170 = vand.u32 %v169, 127
    %vm171 = vcmp.ge.s32.totalorder %v55, 1
    %vm172 = vcmp.ge.s32.totalorder %v154, 1
    %vm173 = vcmp.ge.s32.totalorder %v155, 1
    %vm174 = vcmp.ge.s32.totalorder %v156, 1
    %vm175 = vcmp.ge.s32.totalorder %v157, 1
    %vm176 = vcmp.ge.s32.totalorder %v158, 1
    %vm177 = vcmp.ge.s32.totalorder %v159, 1
    %vm178 = vcmp.ge.s32.totalorder %v160, 1
    %vm179 = vcmp.ge.s32.totalorder %v161, 1
    %vm180 = vcmp.ge.s32.totalorder %v162, 1
    %vm181 = vcmp.ge.s32.totalorder %v163, 1
    %vm182 = vcmp.ge.s32.totalorder %v164, 1
    %vm183 = vcmp.ge.s32.totalorder %v165, 1
    %vm184 = vcmp.ge.s32.totalorder %v166, 1
    %vm185 = vcmp.ge.s32.totalorder %v167, 1
    %vm186 = vcmp.ge.s32.totalorder %v168, 1
    %vm187 = vcmp.le.s32.totalorder %v55, 126
    %vm188 = vcmp.le.s32.totalorder %v154, 126
    %vm189 = vcmp.le.s32.totalorder %v155, 126
    %vm190 = vcmp.le.s32.totalorder %v156, 126
    %vm191 = vcmp.le.s32.totalorder %v157, 126
    %vm192 = vcmp.le.s32.totalorder %v158, 126
    %vm193 = vcmp.le.s32.totalorder %v159, 126
    %vm194 = vcmp.le.s32.totalorder %v160, 126
    %vm195 = vcmp.le.s32.totalorder %v161, 126
    %vm196 = vcmp.le.s32.totalorder %v162, 126
    %vm197 = vcmp.le.s32.totalorder %v163, 126
    %vm198 = vcmp.le.s32.totalorder %v164, 126
    %vm199 = vcmp.le.s32.totalorder %v165, 126
    %vm200 = vcmp.le.s32.totalorder %v166, 126
    %vm201 = vcmp.le.s32.totalorder %v167, 126
    %vm202 = vcmp.le.s32.totalorder %v168, 126
    %vm203 = vmand %vm171, %vm187
    %vm204 = vmand %vm172, %vm188
    %vm205 = vmand %vm173, %vm189
    %vm206 = vmand %vm174, %vm190
    %vm207 = vmand %vm175, %vm191
    %vm208 = vmand %vm176, %vm192
    %vm209 = vmand %vm177, %vm193
    %vm210 = vmand %vm178, %vm194
    %vm211 = vmand %vm179, %vm195
    %vm212 = vmand %vm180, %vm196
    %vm213 = vmand %vm181, %vm197
    %vm214 = vmand %vm182, %vm198
    %vm215 = vmand %vm183, %vm199
    %vm216 = vmand %vm184, %vm200
    %vm217 = vmand %vm185, %vm201
    %vm218 = vmand %vm186, %vm202
    %vm219 = vcmp.eq.s32.totalorder %v170, 0
    %vm220 = vmand %vm203, %vm219
    %vm221 = vmand %vm204, %vm219
    %vm222 = vmand %vm205, %vm219
    %vm223 = vmand %vm206, %vm219
    %vm224 = vmand %vm207, %vm219
    %vm225 = vmand %vm208, %vm219
    %vm226 = vmand %vm209, %vm219
    %vm227 = vmand %vm210, %vm219
    %vm228 = vmand %vm211, %vm219
    %vm229 = vmand %vm212, %vm219
    %vm230 = vmand %vm213, %vm219
    %vm231 = vmand %vm214, %vm219
    %vm232 = vmand %vm215, %vm219
    %vm233 = vmand %vm216, %vm219
    %vm234 = vmand %vm217, %vm219
    %vm235 = vmand %vm218, %vm219
    %v236 = vsel %vm220, 1, 0
    %v237 = vsel %vm221, 1, 0
    %v238 = vsel %vm222, 1, 0
    %v239 = vsel %vm223, 1, 0
    %v240 = vsel %vm224, 1, 0
    %v241 = vsel %vm225, 1, 0
    %v242 = vsel %vm226, 1, 0
    %v243 = vsel %vm227, 1, 0
    %v244 = vsel %vm228, 1, 0
    %v245 = vsel %vm229, 1, 0
    %v246 = vsel %vm230, 1, 0
    %v247 = vsel %vm231, 1, 0
    %v248 = vsel %vm232, 1, 0
    %v249 = vsel %vm233, 1, 0
    %v250 = vsel %vm234, 1, 0
    %v251 = vsel %vm235, 1, 0
    %v252 = vcvt.s32.f32 %v236
    %v253 = vcvt.s32.f32 %v237
    %v254 = vcvt.s32.f32 %v238
    %v255 = vcvt.s32.f32 %v239
    %v256 = vcvt.s32.f32 %v240
    %v257 = vcvt.s32.f32 %v241
    %v258 = vcvt.s32.f32 %v242
    %v259 = vcvt.s32.f32 %v243
    %v260 = vcvt.s32.f32 %v244
    %v261 = vcvt.s32.f32 %v245
    %v262 = vcvt.s32.f32 %v246
    %v263 = vcvt.s32.f32 %v247
    %v264 = vcvt.s32.f32 %v248
    %v265 = vcvt.s32.f32 %v249
    %v266 = vcvt.s32.f32 %v250
    %v267 = vcvt.s32.f32 %v251
    %268 = vmatpush.msra.mxu0 %v267
    %269 = vmatpush.msra.mxu0 %v266
    %270 = vmatpush.msra.mxu0 %v265
    %271 = vmatpush.msra.mxu0 %v264
    %272 = vmatpush.msra.mxu0 %v263
    %273 = vmatpush.msra.mxu0 %v262
    %274 = vmatpush.msra.mxu0 %v261
    %275 = vmatpush.msra.mxu0 %v260
    %276 = vmatpush.msra.mxu0 %v259
    %277 = vmatpush.msra.mxu0 %v258
    %278 = vmatpush.msra.mxu0 %v257
    %279 = vmatpush.msra.mxu0 %v256
    %280 = vmatpush.msra.mxu0 %v255
    %281 = vmatpush.msra.mxu0 %v254
    %282 = vmatpush.msra.mxu0 %v253
    %283 = vmatpush.msra.mxu0 %v252
    %284 = vmatmul.f32.gmra.mxu0 %v146
    %v285 = vpop.f32.mrf.mxu0
    %v286 = vadd.f32 0.0, %v285
    %287 = vmatmul.f32.gmra.mxu0 %v147
    %v288 = vpop.f32.mrf.mxu0
    %v289 = vadd.f32 0.0, %v288
    %290 = vmatmul.f32.gmra.mxu0 %v148
    %v291 = vpop.f32.mrf.mxu0
    %v292 = vadd.f32 0.0, %v291
    %293 = vmatmul.f32.gmra.mxu0 %v149
    %v294 = vpop.f32.mrf.mxu0
    %v295 = vadd.f32 0.0, %v294
    %296 = vmatmul.f32.gmra.mxu0 %v150
    %v297 = vpop.f32.mrf.mxu0
    %v298 = vadd.f32 0.0, %v297
    %299 = vmatmul.f32.gmra.mxu0 %v151
    %v300 = vpop.f32.mrf.mxu0
    %v301 = vadd.f32 0.0, %v300
    %302 = vmatmul.f32.gmra.mxu0 %v152
    %v303 = vpop.f32.mrf.mxu0
    %v304 = vadd.f32 0.0, %v303
    %305 = vmatmul.f32.gmra.mxu0 %v153
    %v306 = vpop.f32.mrf.mxu0
    %v307 = vadd.f32 0.0, %v306
    %308 = vdwg.mxu0
    %vm309 = vcmp.lt.s32.totalorder %v55, 0
    %v310 = vsub.s32 0, %v55
    %v311 = vsel %vm309, %v310, %v55
    %v312 = vshrl.u32 %v311, 4
    %v313 = vand.u32 %v311, 15
    %v314 = vsub.s32 0, %v313
    %v315 = vsel %vm309, %v314, %v313
    %vm316 = vcmp.lt.s32.totalorder %v154, 0
    %v317 = vsub.s32 0, %v154
    %v318 = vsel %vm316, %v317, %v154
    %v319 = vshrl.u32 %v318, 4
    %v320 = vand.u32 %v318, 15
    %v321 = vsub.s32 0, %v320
    %v322 = vsel %vm316, %v321, %v320
    %vm323 = vcmp.lt.s32.totalorder %v155, 0
    %v324 = vsub.s32 0, %v155
    %v325 = vsel %vm323, %v324, %v155
    %v326 = vshrl.u32 %v325, 4
    %v327 = vand.u32 %v325, 15
    %v328 = vsub.s32 0, %v327
    %v329 = vsel %vm323, %v328, %v327
    %vm330 = vcmp.lt.s32.totalorder %v156, 0
    %v331 = vsub.s32 0, %v156
    %v332 = vsel %vm330, %v331, %v156
    %v333 = vshrl.u32 %v332, 4
    %v334 = vand.u32 %v332, 15
    %v335 = vsub.s32 0, %v334
    %v336 = vsel %vm330, %v335, %v334
    %vm337 = vcmp.lt.s32.totalorder %v157, 0
    %v338 = vsub.s32 0, %v157
    %v339 = vsel %vm337, %v338, %v157
    %v340 = vshrl.u32 %v339, 4
    %v341 = vand.u32 %v339, 15
    %v342 = vsub.s32 0, %v341
    %v343 = vsel %vm337, %v342, %v341
    %vm344 = vcmp.lt.s32.totalorder %v158, 0
    %v345 = vsub.s32 0, %v158
    %v346 = vsel %vm344, %v345, %v158
    %v347 = vshrl.u32 %v346, 4
    %v348 = vand.u32 %v346, 15
    %v349 = vsub.s32 0, %v348
    %v350 = vsel %vm344, %v349, %v348
    %vm351 = vcmp.lt.s32.totalorder %v159, 0
    %v352 = vsub.s32 0, %v159
    %v353 = vsel %vm351, %v352, %v159
    %v354 = vshrl.u32 %v353, 4
    %v355 = vand.u32 %v353, 15
    %v356 = vsub.s32 0, %v355
    %v357 = vsel %vm351, %v356, %v355
    %vm358 = vcmp.lt.s32.totalorder %v160, 0
    %v359 = vsub.s32 0, %v160
    %v360 = vsel %vm358, %v359, %v160
    %v361 = vshrl.u32 %v360, 4
    %v362 = vand.u32 %v360, 15
    %v363 = vsub.s32 0, %v362
    %v364 = vsel %vm358, %v363, %v362
    %vm365 = vcmp.ne.s32.totalorder %v315, 0
    %vm366 = vcmp.ne.s32.totalorder %v322, 0
    %vm367 = vcmp.ne.s32.totalorder %v329, 0
    %vm368 = vcmp.ne.s32.totalorder %v336, 0
    %vm369 = vcmp.ne.s32.totalorder %v343, 0
    %vm370 = vcmp.ne.s32.totalorder %v350, 0
    %vm371 = vcmp.ne.s32.totalorder %v357, 0
    %vm372 = vcmp.ne.s32.totalorder %v364, 0
    %vm373 = vcmp.lt.s32.totalorder %v315, 0
    %vm374 = vcmp.lt.s32.totalorder %v322, 0
    %vm375 = vcmp.lt.s32.totalorder %v329, 0
    %vm376 = vcmp.lt.s32.totalorder %v336, 0
    %vm377 = vcmp.lt.s32.totalorder %v343, 0
    %vm378 = vcmp.lt.s32.totalorder %v350, 0
    %vm379 = vcmp.lt.s32.totalorder %v357, 0
    %vm380 = vcmp.lt.s32.totalorder %v364, 0
    %vm381 = vmand %vm373, %vm365
    %vm382 = vmand %vm374, %vm366
    %vm383 = vmand %vm375, %vm367
    %vm384 = vmand %vm376, %vm368
    %vm385 = vmand %vm377, %vm369
    %vm386 = vmand %vm378, %vm370
    %vm387 = vmand %vm379, %vm371
    %vm388 = vmand %vm380, %vm372
    %v389 = vadd.s32 %v315, 16
    %v390 = vadd.s32 %v322, 16
    %v391 = vadd.s32 %v329, 16
    %v392 = vadd.s32 %v336, 16
    %v393 = vadd.s32 %v343, 16
    %v394 = vadd.s32 %v350, 16
    %v395 = vadd.s32 %v357, 16
    %v396 = vadd.s32 %v364, 16
    %v397 = vsel %vm381, %v389, %v315
    %v398 = vsel %vm382, %v390, %v322
    %v399 = vsel %vm383, %v391, %v329
    %v400 = vsel %vm384, %v392, %v336
    %v401 = vsel %vm385, %v393, %v343
    %v402 = vsel %vm386, %v394, %v350
    %v403 = vsel %vm387, %v395, %v357
    %v404 = vsel %vm388, %v396, %v364
    %vm405 = vcmp.ge.s32.totalorder %v397, 1
    %vm406 = vcmp.ge.s32.totalorder %v398, 1
    %vm407 = vcmp.ge.s32.totalorder %v399, 1
    %vm408 = vcmp.ge.s32.totalorder %v400, 1
    %vm409 = vcmp.ge.s32.totalorder %v401, 1
    %vm410 = vcmp.ge.s32.totalorder %v402, 1
    %vm411 = vcmp.ge.s32.totalorder %v403, 1
    %vm412 = vcmp.ge.s32.totalorder %v404, 1
    %vm413 = vcmp.le.s32.totalorder %v397, 14
    %vm414 = vcmp.le.s32.totalorder %v398, 14
    %vm415 = vcmp.le.s32.totalorder %v399, 14
    %vm416 = vcmp.le.s32.totalorder %v400, 14
    %vm417 = vcmp.le.s32.totalorder %v401, 14
    %vm418 = vcmp.le.s32.totalorder %v402, 14
    %vm419 = vcmp.le.s32.totalorder %v403, 14
    %vm420 = vcmp.le.s32.totalorder %v404, 14
    %vm421 = vmand %vm405, %vm413
    %vm422 = vmand %vm406, %vm414
    %vm423 = vmand %vm407, %vm415
    %vm424 = vmand %vm408, %vm416
    %vm425 = vmand %vm409, %vm417
    %vm426 = vmand %vm410, %vm418
    %vm427 = vmand %vm411, %vm419
    %vm428 = vmand %vm412, %vm420
    %v429 = vsel %vm421, 1, 0
    %v430 = vsel %vm422, 1, 0
    %v431 = vsel %vm423, 1, 0
    %v432 = vsel %vm424, 1, 0
    %v433 = vsel %vm425, 1, 0
    %v434 = vsel %vm426, 1, 0
    %v435 = vsel %vm427, 1, 0
    %v436 = vsel %vm428, 1, 0
    %v437 = vcvt.s32.f32 %v429
    %v438 = vcvt.s32.f32 %v430
    %v439 = vcvt.s32.f32 %v431
    %v440 = vcvt.s32.f32 %v432
    %v441 = vcvt.s32.f32 %v433
    %v442 = vcvt.s32.f32 %v434
    %v443 = vcvt.s32.f32 %v435
    %v444 = vcvt.s32.f32 %v436
    %v445 = vmul.f32 %v286, %v437
    %v446 = vmul.f32 %v289, %v438
    %v447 = vmul.f32 %v292, %v439
    %v448 = vmul.f32 %v295, %v440
    %v449 = vmul.f32 %v298, %v441
    %v450 = vmul.f32 %v301, %v442
    %v451 = vmul.f32 %v304, %v443
    %v452 = vmul.f32 %v307, %v444
    %v453 = vadd.f32 %v445, %v446
    %v454 = vadd.f32 %v453, %v447
    %v455 = vadd.f32 %v454, %v448
    %v456 = vadd.f32 %v455, %v449
    %v457 = vadd.f32 %v456, %v450
    %v458 = vadd.f32 %v457, %v451
    %v459 = vadd.f32 %v458, %v452
    %460 = vadd.xlane.f32.xlu0 %v459
    %v461 = vpop.xlane.xlu0 %460
    %v462 = vrot.slane %v461, 4
    %v463 = vadd.f32 %v461, %v462
    %v464 = vrot.slane %v463, 2
    %v465 = vadd.f32 %v463, %v464
    %v466 = vrot.slane %v465, 1
    %v467 = vadd.f32 %v465, %v466
    %s468 = vtos %v467
    %v469 = vld [vmem:[#allocation5] sm:$0x1]
    %v470 = vstv %s468
    %v471 = vadd.f32 %v469, %v470
    %vm472 = vcmask 0
    %473 = vst.msk [vmem:[#allocation5] sm:$0x1] %vm472, %v471
    // Predicated region
    $region14: #{tpu_custom_call.1} parent=1 // pred_check
      %p474 = pneg %p32
    $region15: #{tpu_custom_call.1} parent=1 // pred_check_branch
      %476 = sbr.rel (%p474) target = $region17
    $region16: #{tpu_custom_call.1} parent=1 // pred_region
      %v477 = vld [vmem:[#allocation5] sm:$0x1]
      %v478 = vmul.f32 %v477, 1.771542e-05
      %479 = vst.msk [vmem:[#allocation5] sm:$0x1] %vm472, %v478
    $region17: #{tpu_custom_call.1} parent=1 // pred_fallthru
      _
    // Predicated region
    $region18: #{tpu_custom_call.1} parent=1 // pred_check
      _
    $region19: #{tpu_custom_call.1} parent=1 // pred_check_branch
      %481 = sbr.rel (0) target = $region21
    $region20: #{tpu_custom_call.1} parent=1 // pred_region
      %483 = vsyncadd [#allocation4], 0
      %s485 = sshll.u32 [#allocation5], 4
      %s486 = int_to_ptr.vmem [resolvable:$true] %s485
      %s487 = sshll.u32 %s1, 4
      %s488 = int_to_ptr.hbm [resolvable:$true] %s487
      %490 = dma.vmem_to_hbm [thread:$0]  %s486, 16, %s488, [#allocation4]
    $region21: #{tpu_custom_call.1} parent=1 // pred_fallthru
      _
    // Predicated region
    $region22: #{tpu_custom_call.1} parent=1 // pred_check
      _
    $region23: #{tpu_custom_call.1} parent=1 // pred_check_branch
      %492 = sbr.rel (0) target = $region25
    $region24: #{tpu_custom_call.1} parent=1 // pred_region
      %494 = dma.done [#allocation4], 16
    $region25: #{tpu_custom_call.1} parent=1 // pred_fallthru
      _
    %495 = vsyncpa [#allocation3], 1
    %496 = vsyncpa [#allocation4], 1

</llo_original>
